<compile_context>
chip_gen: v7x
topology: tpu7x:2x2x1
jax: 0.10.0
libtpu: 0.0.40
codegen_flags: <defaults>
</compile_context>

<pallas_src>
import jax
import jax.numpy as jnp
from jax.experimental import pallas as pl
from jax.experimental.pallas import tpu as pltpu


def _scale_mul_kernel(scale_ref, x_ref, o_ref):
    # scale_ref: (C_blk, 1), x_ref: (C_blk, HW) -- VPU lane-broadcast multiply.
    o_ref[...] = scale_ref[...] * x_ref[...]


def channel_scale_mul(scale, x):
    """Computes scale * x with scale [N, C, 1, 1] and x [N, C, H, W] (N == 1)."""
    n, c, h, w = x.shape
    assert scale.shape == (n, c, 1, 1)
    assert n == 1, "kernel written for batch 1 (as in the reference module)"
    hw = h * w

    x2d = x.reshape(c, hw)      # (C, H*W): free reshape, spatial axis on lanes
    s2d = scale.reshape(c, 1)   # (C, 1):   per-channel scale, broadcast on lanes

    # Split channels into 2 blocks when legal (sublane-aligned halves):
    # v7x -> one block per TensorCore; v5e/v6e -> 2-step DMA pipelining.
    if c % 2 == 0 and (c // 2) % 8 == 0:
        n_blocks = 2
    else:
        n_blocks = 1
    c_blk = c // n_blocks

    out2d = pl.pallas_call(
        _scale_mul_kernel,
        out_shape=jax.ShapeDtypeStruct((c, hw), x.dtype),
        grid=(n_blocks,),
        in_specs=[
            pl.BlockSpec((c_blk, 1), lambda i: (i, 0)),    # scale slice (tiny)
            pl.BlockSpec((c_blk, hw), lambda i: (i, 0)),   # x slice
        ],
        out_specs=pl.BlockSpec((c_blk, hw), lambda i: (i, 0)),
        # x is dead after this op in the reference graph -> reuse its buffer.
        input_output_aliases={1: 0},
        compiler_params=pltpu.CompilerParams(
            dimension_semantics=("parallel",)),
    )(s2d, x2d)

    return out2d.reshape(n, c, h, w)


# jit the wrapper so the reshape / pallas_call / aliasing all live inside one
# XLA computation (aliasing an intermediate buffer is then always safe).
channel_scale_mul_jit = jax.jit(channel_scale_mul)


if __name__ == "__main__":
    key = jax.random.PRNGKey(0)
    k1, k2 = jax.random.split(key)

    # Small shapes consistent with the module ([1, C, 7, 7] * [1, C, 1, 1]).
    C, H, W = 128, 7, 7
    x853 = jax.random.normal(k1, (1, C, H, W), dtype=jnp.float32)
    x858 = jax.random.normal(k2, (1, C, 1, 1), dtype=jnp.float32)

    out = channel_scale_mul_jit(x858, x853)
    out = jax.block_until_ready(out)

    # correctness check vs plain JAX broadcast multiply
    ref = x858 * x853
    assert out.shape == ref.shape
    assert jnp.allclose(out, ref), "mismatch vs reference"

    print("KERNEL_OK")
</pallas_src>

<mosaic_0001>
module attributes {stable_mosaic.version = 11 : i64} {
  func.func @_scale_mul_kernel(%arg0: i32, %arg1: memref<64x1xf32, #tpu.memory_space<vmem>>, %arg2: memref<64x49xf32, #tpu.memory_space<vmem>>, %arg3: memref<64x49xf32, #tpu.memory_space<vmem>>) attributes {dimension_semantics = [#tpu.dimension_semantics<parallel>], iteration_bounds = array<i64: 2>, scalar_prefetch = 0 : i64, scratch_operands = 0 : i64, tpu.core_type = #tpu.core_type<tc>, window_params = [{transform_indices = @transform_0, window_bounds = array<i64: 64, 1>}, {transform_indices = @transform_1, window_bounds = array<i64: 64, 49>}, {transform_indices = @transform_2, window_bounds = array<i64: 64, 49>}]} {
    %c0 = arith.constant 0 : index
    %c0_0 = arith.constant 0 : index
    %0 = vector.load %arg1[%c0, %c0_0] : memref<64x1xf32, #tpu.memory_space<vmem>>, vector<64x1xf32>
    %c0_1 = arith.constant 0 : index
    %c0_2 = arith.constant 0 : index
    %1 = vector.load %arg2[%c0_1, %c0_2] : memref<64x49xf32, #tpu.memory_space<vmem>>, vector<64x49xf32>
    %2 = vector.broadcast %0 : vector<64x1xf32> to vector<64x49xf32>
    %3 = arith.mulf %2, %1 : vector<64x49xf32>
    %c0_3 = arith.constant 0 : index
    %c0_4 = arith.constant 0 : index
    %4 = vector.load %arg3[%c0_3, %c0_4] : memref<64x49xf32, #tpu.memory_space<vmem>>, vector<64x49xf32>
    tpu.vector_store %arg3[%c0_3, %c0_4], %3 {strides = array<i32>} : memref<64x49xf32, #tpu.memory_space<vmem>>, vector<64x49xf32>,
    return
  }
  func.func @transform_0(%arg0: i32) -> (i32, i32) {
    %c0_i32 = arith.constant 0 : i32
    %c0_i32_0 = arith.constant 0 : i32
    return %arg0, %c0_i32 : i32, i32
  }
  func.func @transform_1(%arg0: i32) -> (i32, i32) {
    %c0_i32 = arith.constant 0 : i32
    %c0_i32_0 = arith.constant 0 : i32
    return %arg0, %c0_i32 : i32, i32
  }
  func.func @transform_2(%arg0: i32) -> (i32, i32) {
    %c0_i32 = arith.constant 0 : i32
    %c0_i32_0 = arith.constant 0 : i32
    return %arg0, %c0_i32 : i32, i32
  }
}

</mosaic_0001>

<llo_original>
// kernel: channel_scale_mul.1
$region0: #{channel_scale_mul.1}
  #allocation0 [shape = 'u32[]', space=smem, size = 0x4, offset = 0x4, fixed_abs, tag = 'smem constant byte address 0x4 - core index']
  #allocation1 [shape = 'u32[144,128]{1,0:T(1,128)}', space=vmem, size = 0x12000, scoped, tag = 'internal scratch']
  %s0 = inlined_call_operand.vmem [shape: f32[128,1], index: 0, kind: input, shape index: {}]
  %s1 = inlined_call_operand.vmem [shape: f32[128,49], index: 1, kind: input, shape index: {}, may-alias: {1,2}]
  %s2 = inlined_call_operand.vmem [shape: f32[128,49], index: 2, kind: output, shape index: {}, may-alias: {1,2}]
  %s3 = sld [smem:[#allocation0]]
  $region41: #{channel_scale_mul.1} parent=0
    _
  %s5 = ssub.s32 1, %s3
  %s6 = scalar_select 0, %s5, %s3
  loop: start=0, step=1, limit=4
  $region2: #{channel_scale_mul.1} parent=0 // loop_pre_header
    _
  $region3: #{channel_scale_mul.1} parent=0 // loop_header
    %s8 = sphi 0, %s12
    %p9 = scmp.ge.s32.totalorder %s8, 4
    %s18 = sphi 0, %s20
    %s21 = sphi 0, %s18
    %s22 = sphi 0, %s21
    %s38 = sphi 0, %s22
    %s44 = sphi 0, %s46
    %s47 = sphi 0, %s44
    %s48 = sphi 0, %s47
    %s64 = sphi 0, %s48
    %s70 = sphi 0, %s72
    %s73 = sphi 0, %s70
    %s74 = sphi 0, %s73
    %s90 = sphi 0, %s74
  $region4: #{channel_scale_mul.1} parent=0 // loop_header_branch
    %11 = sbr.rel (%p9) target = $region8
  $region5: #{channel_scale_mul.1} parent=0 // loop_body
    %s13 = ssub.s32 %s8, 1
    %s14 = ssub.s32 %s8, 2
    %s15 = sadd.s32 %s8, 1
    %s16 = ssub.s32 %s8, %s15
    %p17 = scmp.eq.s32.totalorder %s16, 0
    %s19 = sadd.s32 %s18, 1
    %s20 = scalar_select %p17, %s18, %s19
    %p23 = pneg %p17
    %p24 = scmp.eq.s32.totalorder %s8, 1
    %p25 = por %p23, %p24
    %p26 = scmp.ne.s32.totalorder %s18, %s21
    %p27 = scmp.eq.s32.totalorder %s8, 0
    %p28 = por %p26, %p27
    %p29 = scmp.ne.s32.totalorder %s18, %s21
    %p30 = scmp.eq.s32.totalorder %s13, 1
    %p31 = por %p29, %p30
    %p32 = scmp.ne.s32.totalorder %s21, %s22
    %p33 = scmp.eq.s32.totalorder %s13, 0
    %p34 = por %p32, %p33
    %p35 = scmp.ne.s32.totalorder %s21, %s22
    %p36 = scmp.eq.s32.totalorder %s14, 1
    %p37 = por %p35, %p36
    %p39 = scmp.ne.s32.totalorder %s22, %s38
    %p40 = scmp.eq.s32.totalorder %s14, 0
    %p41 = por %p39, %p40
    %s42 = ssub.s32 %s8, %s15
    %p43 = scmp.eq.s32.totalorder %s42, 0
    %s45 = sadd.s32 %s44, 1
    %s46 = scalar_select %p43, %s44, %s45
    %p49 = pneg %p43
    %p50 = scmp.eq.s32.totalorder %s8, 1
    %p51 = por %p49, %p50
    %p52 = scmp.ne.s32.totalorder %s44, %s47
    %p53 = scmp.eq.s32.totalorder %s8, 0
    %p54 = por %p52, %p53
    %p55 = scmp.ne.s32.totalorder %s44, %s47
    %p56 = scmp.eq.s32.totalorder %s13, 1
    %p57 = por %p55, %p56
    %p58 = scmp.ne.s32.totalorder %s47, %s48
    %p59 = scmp.eq.s32.totalorder %s13, 0
    %p60 = por %p58, %p59
    %p61 = scmp.ne.s32.totalorder %s47, %s48
    %p62 = scmp.eq.s32.totalorder %s14, 1
    %p63 = por %p61, %p62
    %p65 = scmp.ne.s32.totalorder %s48, %s64
    %p66 = scmp.eq.s32.totalorder %s14, 0
    %p67 = por %p65, %p66
    %s68 = ssub.s32 %s8, %s15
    %p69 = scmp.eq.s32.totalorder %s68, 0
    %s71 = sadd.s32 %s70, 1
    %s72 = scalar_select %p69, %s70, %s71
    %p75 = pneg %p69
    %p76 = scmp.eq.s32.totalorder %s8, 1
    %p77 = por %p75, %p76
    %p78 = scmp.ne.s32.totalorder %s70, %s73
    %p79 = scmp.eq.s32.totalorder %s8, 0
    %p80 = por %p78, %p79
    %p81 = scmp.ne.s32.totalorder %s70, %s73
    %p82 = scmp.eq.s32.totalorder %s13, 1
    %p83 = por %p81, %p82
    %p84 = scmp.ne.s32.totalorder %s73, %s74
    %p85 = scmp.eq.s32.totalorder %s13, 0
    %p86 = por %p84, %p85
    %p87 = scmp.ne.s32.totalorder %s73, %s74
    %p88 = scmp.eq.s32.totalorder %s14, 1
    %p89 = por %p87, %p88
    %p91 = scmp.ne.s32.totalorder %s74, %s90
    %p92 = scmp.eq.s32.totalorder %s14, 0
    %p93 = por %p91, %p92
    %p94 = scmp.le.s32.totalorder 1, %s8
    %p95 = scmp.lt.s32.totalorder %s8, 3
    %p96 = pnand %p94, %p95
    %p97 = pneg %p96
    // Predicated region
    $region9: #{channel_scale_mul.1} parent=5 // pred_check
      _
    $region10: #{channel_scale_mul.1} parent=5 // pred_check_branch
      %99 = sbr.rel (%p96) target = $region12
    $region11: #{channel_scale_mul.1} parent=5 // pred_region
      %s100 = ssub.s32 %s8, 1
    $region12: #{channel_scale_mul.1} parent=5 // pred_fallthru
      _
    %p101 = scmp.lt.s32.totalorder %s8, 2
    // Predicated region
    $region13: #{channel_scale_mul.1} parent=5 // pred_check
      %p102 = pneg %p101
    $region14: #{channel_scale_mul.1} parent=5 // pred_check_branch
      %104 = sbr.rel (%p102) target = $region16
    $region15: #{channel_scale_mul.1} parent=5 // pred_region
      // Predicated region
      $region17: #{channel_scale_mul.1} parent=15 // pred_check
        %p105 = pneg %p28
      $region18: #{channel_scale_mul.1} parent=15 // pred_check_branch
        %107 = sbr.rel (%p105) target = $region20
      $region19: #{channel_scale_mul.1} parent=15 // pred_region
        %s108 = smul.u32 8, %s8
        %p109 = scmp.lt.s32.totalorder %s108, 15
        %s110 = scalar_select %p109, %s108, 15
        %s111 = smul.addr %s110, 8
        %s112 = scalar_lea.vmem %s0, %s111
        %s113 = smul.u32 8, %s8
      $region20: #{channel_scale_mul.1} parent=15 // pred_fallthru
        _
      // Predicated region
      $region21: #{channel_scale_mul.1} parent=15 // pred_check
        %p114 = pneg %p54
      $region22: #{channel_scale_mul.1} parent=15 // pred_check_branch
        %116 = sbr.rel (%p114) target = $region24
      $region23: #{channel_scale_mul.1} parent=15 // pred_region
        %s117 = smul.u32 8, %s8
        %p118 = scmp.lt.s32.totalorder %s117, 15
        %s119 = scalar_select %p118, %s117, 15
        %s120 = smul.addr %s119, 8
        %s121 = scalar_lea.vmem %s1, %s120
        %s122 = smul.u32 8, %s8
      $region24: #{channel_scale_mul.1} parent=15 // pred_fallthru
        _
    $region16: #{channel_scale_mul.1} parent=5 // pred_fallthru
      _
    %p123 = scmp.le.s32.totalorder 1, %s8
    %p124 = scmp.lt.s32.totalorder %s8, 3
    %p125 = pnand %p123, %p124
    %p126 = pneg %p125
    // Predicated region
    $region25: #{channel_scale_mul.1} parent=5 // pred_check
      _
    $region26: #{channel_scale_mul.1} parent=5 // pred_check_branch
      %128 = sbr.rel (%p125) target = $region28
    $region27: #{channel_scale_mul.1} parent=5 // pred_region
      %s129 = ssub.s32 %s8, 1
      %s130 = smul.u32 8, %s13
      %p131 = scmp.lt.s32.totalorder %s130, 15
      %s132 = scalar_select %p131, %s130, 15
      %s133 = smul.addr %s132, 8
      %s134 = scalar_lea.vmem %s0, %s133
      %p135 = pneg %p34
      %p136 = pneg %p31
      %s137 = smul.u32 8, %s13
      %p138 = scmp.lt.s32.totalorder %s137, 15
      %s139 = scalar_select %p138, %s137, 15
      %s140 = smul.addr %s139, 8
      %s141 = scalar_lea.vmem %s1, %s140
      %p142 = pneg %p60
      %p143 = pneg %p57
      %p144 = pneg %p86
      %p145 = pneg %p83
      %s146 = smul.u32 8, %s13
      %p147 = scmp.lt.s32.totalorder %s146, 15
      %s148 = scalar_select %p147, %s146, 15
      %s149 = smul.addr %s148, 8
      %s150 = scalar_lea.vmem %s2, %s149
      %s151 = smul.u32 8, %s13
      %p152 = scmp.lt.s32.totalorder %s151, 15
      %s153 = scalar_select %p152, %s151, 15
      %s154 = smul.addr %s153, 8
      %s155 = scalar_lea.vmem %s0, %s154
      %s156 = smul.u32 8, %s13
      %s157 = smul.u32 8, %s13
      %p158 = scmp.lt.s32.totalorder %s157, 15
      %s159 = scalar_select %p158, %s157, 15
      %s160 = smul.addr %s159, 8
      %s161 = scalar_lea.vmem %s1, %s160
      %s162 = smul.u32 8, %s13
      %s163 = smul.u32 8, %s13
      %p164 = scmp.lt.s32.totalorder %s163, 15
      %s165 = scalar_select %p164, %s163, 15
      %s166 = smul.addr %s165, 8
      %s167 = scalar_lea.vmem %s2, %s166
      %s168 = smul.u32 8, %s13
      %v169 = vld [vmem:[%s155] sm:$0xff]
      %v170 = vld [vmem:[%s155 + $0x8] sm:$0xff]
      %v171 = vld [vmem:[%s155 + $0x10] sm:$0xff]
      %v172 = vld [vmem:[%s155 + $0x18] sm:$0xff]
      %v173 = vld [vmem:[%s155 + $0x20] sm:$0xff]
      %v174 = vld [vmem:[%s155 + $0x28] sm:$0xff]
      %v175 = vld [vmem:[%s155 + $0x30] sm:$0xff]
      %v176 = vld [vmem:[%s155 + $0x38] sm:$0xff]
      %v177 = vld [vmem:[%s161] sm:$0xff]
      %v178 = vld [vmem:[%s161 + $0x8] sm:$0xff]
      %v179 = vld [vmem:[%s161 + $0x10] sm:$0xff]
      %v180 = vld [vmem:[%s161 + $0x18] sm:$0xff]
      %v181 = vld [vmem:[%s161 + $0x20] sm:$0xff]
      %v182 = vld [vmem:[%s161 + $0x28] sm:$0xff]
      %v183 = vld [vmem:[%s161 + $0x30] sm:$0xff]
      %v184 = vld [vmem:[%s161 + $0x38] sm:$0xff]
      %186 = vset.pattern.permute.xlu0 0
      %187 = vperm.xlu0 %186, %v169
      %v188 = vpop.permute.xlu0 %187
      %191 = vset.pattern.permute.xlu0 0
      %192 = vperm.xlu0 %191, %v170
      %v193 = vpop.permute.xlu0 %192
      %196 = vset.pattern.permute.xlu0 0
      %197 = vperm.xlu0 %196, %v171
      %v198 = vpop.permute.xlu0 %197
      %201 = vset.pattern.permute.xlu0 0
      %202 = vperm.xlu0 %201, %v172
      %v203 = vpop.permute.xlu0 %202
      %206 = vset.pattern.permute.xlu0 0
      %207 = vperm.xlu0 %206, %v173
      %v208 = vpop.permute.xlu0 %207
      %211 = vset.pattern.permute.xlu0 0
      %212 = vperm.xlu0 %211, %v174
      %v213 = vpop.permute.xlu0 %212
      %216 = vset.pattern.permute.xlu0 0
      %217 = vperm.xlu0 %216, %v175
      %v218 = vpop.permute.xlu0 %217
      %221 = vset.pattern.permute.xlu0 0
      %222 = vperm.xlu0 %221, %v176
      %v223 = vpop.permute.xlu0 %222
      %v225 = vmul.f32 %v188, %v177
      %v226 = vmul.f32 %v193, %v178
      %v227 = vmul.f32 %v198, %v179
      %v228 = vmul.f32 %v203, %v180
      %v229 = vmul.f32 %v208, %v181
      %v230 = vmul.f32 %v213, %v182
      %v231 = vmul.f32 %v218, %v183
      %v232 = vmul.f32 %v223, %v184
      %vm233 = vcmask 400384
      %234 = vst.msk [vmem:[%s167] sm:$0xff] %vm233, %v225
      %235 = vst.msk [vmem:[%s167 + $0x8] sm:$0xff] %vm233, %v226
      %236 = vst.msk [vmem:[%s167 + $0x10] sm:$0xff] %vm233, %v227
      %237 = vst.msk [vmem:[%s167 + $0x18] sm:$0xff] %vm233, %v228
      %238 = vst.msk [vmem:[%s167 + $0x20] sm:$0xff] %vm233, %v229
      %239 = vst.msk [vmem:[%s167 + $0x28] sm:$0xff] %vm233, %v230
      %240 = vst.msk [vmem:[%s167 + $0x30] sm:$0xff] %vm233, %v231
      %241 = vst.msk [vmem:[%s167 + $0x38] sm:$0xff] %vm233, %v232
      %s242 = smul.u32 8, %s13
      %p243 = scmp.lt.s32.totalorder %s242, 15
      %s244 = scalar_select %p243, %s242, 15
      %s245 = smul.addr %s244, 8
      %s246 = scalar_lea.vmem %s2, %s245
      // Predicated region
      $region29: #{channel_scale_mul.1} parent=27 // pred_check
        %p247 = pneg %p83
      $region30: #{channel_scale_mul.1} parent=27 // pred_check_branch
        %249 = sbr.rel (%p247) target = $region32
      $region31: #{channel_scale_mul.1} parent=27 // pred_region
        %s250 = smul.u32 8, %s13
      $region32: #{channel_scale_mul.1} parent=27 // pred_fallthru
        _
    $region28: #{channel_scale_mul.1} parent=5 // pred_fallthru
      _
    %p251 = scmp.le.s32.totalorder 2, %s8
    // Predicated region
    $region33: #{channel_scale_mul.1} parent=5 // pred_check
      %p252 = pneg %p251
    $region34: #{channel_scale_mul.1} parent=5 // pred_check_branch
      %254 = sbr.rel (%p252) target = $region36
    $region35: #{channel_scale_mul.1} parent=5 // pred_region
      %s255 = ssub.s32 %s8, 2
      // Predicated region
      $region37: #{channel_scale_mul.1} parent=35 // pred_check
        %p256 = pneg %p89
      $region38: #{channel_scale_mul.1} parent=35 // pred_check_branch
        %258 = sbr.rel (%p256) target = $region40
      $region39: #{channel_scale_mul.1} parent=35 // pred_region
        %s259 = smul.u32 8, %s14
        %p260 = scmp.lt.s32.totalorder %s259, 15
        %s261 = scalar_select %p260, %s259, 15
        %s262 = smul.addr %s261, 8
        %s263 = scalar_lea.vmem %s2, %s262
      $region40: #{channel_scale_mul.1} parent=35 // pred_fallthru
        _
    $region36: #{channel_scale_mul.1} parent=5 // pred_fallthru
      _
  $region6: #{channel_scale_mul.1} parent=0 // loop_footer
    %s12 = sadd.s32 1, %s8
  $region7: #{channel_scale_mul.1} parent=0 // loop_footer_branch
    %7 = sbr.rel target = $region3
  $region8: #{channel_scale_mul.1} parent=0 // loop_exit
    _

</llo_original>
